<compile_context>
chip_gen: v6e
topology: v6e:2x2x1
jax: 0.10.0
libtpu: 0.0.40
codegen_flags: <defaults>
</compile_context>

<pallas_src>
import jax
import jax.numpy as jnp
from jax.experimental import pallas as pl
from jax.experimental.pallas import tpu as pltpu

# ---------------------------------------------------------------------------
# Problem sizes (small, consistent with the module: classifier is 2048 -> 10)
# ---------------------------------------------------------------------------
B, C_IN, H, W = 2, 3, 16, 16        # input images, NCHW in the wrapper API
C_STEM = 64                          # conv-stem output channels
Z_DIM = 2048                         # SimSiam embedding dim (fixed by module)
N_CLS = 10                           # classifier output dim (fixed by module)
KH = KW = 3                          # conv kernel
P = H * W                            # spatial positions per image
K = KH * KW * C_IN                   # im2col patch length (27)
K_PAD = 32                           # padded contraction dim (clean tiles)
N_PAD = 128                          # lane-dense padded output width


# ---------------------------------------------------------------------------
# Pallas kernel: conv-as-matmul + ReLU + avg-pool (XLU reduce) + fused linear
# ---------------------------------------------------------------------------
def simsiam_downstream_kernel(cols_ref, wstem_ref, bstem_ref,
                              wfused_ref, bfused_ref, out_ref):
    wstem = wstem_ref[...]                      # [K_PAD, C_STEM] bf16
    bstem = bstem_ref[...]                      # [1, C_STEM]     f32

    # conv stem (3x3, pad 1) via im2col matmul per image, then ReLU and
    # global average pool as a cross-sublane reduction (no pooling matmul).
    feats = []
    for b in range(B):                          # B is tiny and static
        conv_b = jnp.dot(cols_ref[b], wstem,
                         preferred_element_type=jnp.float32)      # [P, C_STEM]
        conv_b = jnp.maximum(conv_b + bstem, 0.0)
        feats.append(jnp.sum(conv_b, axis=0, keepdims=True) * (1.0 / P))
    feat = jnp.concatenate(feats, axis=0)       # [B, C_STEM] f32

    # fused (projection @ classifier): logits = feat @ Wf + bf, lane-padded.
    logits = jnp.dot(feat, wfused_ref[...],
                     preferred_element_type=jnp.float32) + bfused_ref[...]
    out_ref[...] = logits.astype(out_ref.dtype)                   # [B, N_PAD]


# ---------------------------------------------------------------------------
# JAX glue: im2col, weight fusion / padding, pallas_call wrapper
# ---------------------------------------------------------------------------
def _im2col_nhwc(x_nhwc):
    """x: [B, H, W, C_IN] -> columns [B, P, K_PAD] (pad=1, stride=1, f32)."""
    xp = jnp.pad(x_nhwc, ((0, 0), (1, 1), (1, 1), (0, 0)))
    patches = []
    for dy in range(KH):
        for dx in range(KW):
            patches.append(xp[:, dy:dy + H, dx:dx + W, :])
    cols = jnp.concatenate(patches, axis=-1)                      # [B, H, W, K]
    cols = cols.reshape(B, P, K).astype(jnp.float32)
    return jnp.pad(cols, ((0, 0), (0, 0), (0, K_PAD - K)))        # [B, P, K_PAD]


def simsiam_downstream_forward(x_nchw, params):
    """Forward pass: x [B, C_IN, H, W] (NCHW) -> logits [B, 10]."""
    wstem, bstem, wproj, bproj, wcls, bcls = params

    x_nhwc = jnp.transpose(x_nchw, (0, 2, 3, 1))                  # NCHW -> NHWC
    cols = _im2col_nhwc(x_nhwc).astype(jnp.bfloat16)              # [B, P, K_PAD]

    # stem weight: pad contraction dim to K_PAD, ship as bf16 (f32 accumulate)
    wstem_p = jnp.pad(wstem, ((0, K_PAD - K), (0, 0))).astype(jnp.bfloat16)

    # fold projection (64->2048) and classifier (2048->10) into one 64x10
    # matmul; pad the output dim to 128 lanes for unmasked stores.
    w_fused = wproj @ wcls                                        # [C_STEM, 10]
    b_fused = bproj @ wcls + bcls                                 # [1, 10]
    w_fused = jnp.pad(w_fused, ((0, 0), (0, N_PAD - N_CLS)))      # [C_STEM, 128]
    b_fused = jnp.pad(b_fused, ((0, 0), (0, N_PAD - N_CLS)))      # [1, 128]

    out = pl.pallas_call(
        simsiam_downstream_kernel,
        out_shape=jax.ShapeDtypeStruct((B, N_PAD), jnp.float32),
        grid=(1,),   # single-shot workload: more grid steps = pure overhead
        in_specs=[
            pl.BlockSpec((B, P, K_PAD), lambda i: (0, 0, 0)),     # cols (bf16)
            pl.BlockSpec((K_PAD, C_STEM), lambda i: (0, 0)),      # stem weight
            pl.BlockSpec((1, C_STEM), lambda i: (0, 0)),          # stem bias
            pl.BlockSpec((C_STEM, N_PAD), lambda i: (0, 0)),      # fused weight
            pl.BlockSpec((1, N_PAD), lambda i: (0, 0)),           # fused bias
        ],
        out_specs=pl.BlockSpec((B, N_PAD), lambda i: (0, 0)),
        compiler_params=pltpu.CompilerParams(
            dimension_semantics=("arbitrary",)),
    )(cols, wstem_p, bstem, w_fused, b_fused)
    return out[:, :N_CLS]                                         # [B, 10]


def init_params(key):
    """Deterministic synthetic parameter init (shapes implied by the module)."""
    k1, k2, k3, k4, k5, k6 = jax.random.split(key, 6)
    wstem = 0.05 * jax.random.normal(k1, (K, C_STEM), jnp.float32)
    bstem = 0.01 * jax.random.normal(k2, (1, C_STEM), jnp.float32)
    wproj = 0.02 * jax.random.normal(k3, (C_STEM, Z_DIM), jnp.float32)
    bproj = 0.01 * jax.random.normal(k4, (1, Z_DIM), jnp.float32)
    # nn.Linear(2048, 10): weight [10, 2048], computes x @ W.T + b; we store W.T.
    wcls = 0.02 * jax.random.normal(k5, (Z_DIM, N_CLS), jnp.float32)
    bcls = 0.01 * jax.random.normal(k6, (1, N_CLS), jnp.float32)
    return (wstem, bstem, wproj, bproj, wcls, bcls)


def _reference_forward(x_nchw, params):
    """Pure-JAX f32 reference (unfused, matches the module semantics)."""
    wstem, bstem, wproj, bproj, wcls, bcls = params
    x_nhwc = jnp.transpose(x_nchw, (0, 2, 3, 1))
    cols = _im2col_nhwc(x_nhwc)[..., :K].reshape(B * P, K)        # unpadded cols
    conv = jnp.maximum(cols @ wstem + bstem, 0.0)                 # [B*P, C_STEM]
    feat = conv.reshape(B, P, C_STEM).mean(axis=1)                # [B, C_STEM]
    z = feat @ wproj + bproj                                      # [B, 2048]
    return z @ wcls + bcls                                        # [B, 10]


if __name__ == "__main__":
    key = jax.random.PRNGKey(0)
    kx, kp = jax.random.split(key)
    x = jax.random.normal(kx, (B, C_IN, H, W), jnp.float32)       # NCHW input
    params = init_params(kp)

    logits = simsiam_downstream_forward(x, params)
    logits = jax.block_until_ready(logits)

    ref = _reference_forward(x, params)
    assert logits.shape == (B, N_CLS)
    assert jnp.allclose(logits, ref, atol=1e-3, rtol=1e-3)
    print("KERNEL_OK")
</pallas_src>

<mosaic_0001>
module attributes {stable_mosaic.version = 11 : i64} {
  func.func @simsiam_downstream_kernel(%arg0: i32, %arg1: memref<2x256x32xbf16, #tpu.memory_space<vmem>>, %arg2: memref<32x64xbf16, #tpu.memory_space<vmem>>, %arg3: memref<1x64xf32, #tpu.memory_space<vmem>>, %arg4: memref<64x128xf32, #tpu.memory_space<vmem>>, %arg5: memref<1x128xf32, #tpu.memory_space<vmem>>, %arg6: memref<2x128xf32, #tpu.memory_space<vmem>>) attributes {dimension_semantics = [#tpu.dimension_semantics<arbitrary>], iteration_bounds = array<i64: 1>, scalar_prefetch = 0 : i64, scratch_operands = 0 : i64, tpu.core_type = #tpu.core_type<tc>, window_params = [{pipeline_mode = #tpu.pipeline_mode<synchronous>, transform_indices = @transform_0, window_bounds = array<i64: 2, 256, 32>}, {pipeline_mode = #tpu.pipeline_mode<synchronous>, transform_indices = @transform_1, window_bounds = array<i64: 32, 64>}, {pipeline_mode = #tpu.pipeline_mode<synchronous>, transform_indices = @transform_2, window_bounds = array<i64: 1, 64>}, {pipeline_mode = #tpu.pipeline_mode<synchronous>, transform_indices = @transform_3, window_bounds = array<i64: 64, 128>}, {pipeline_mode = #tpu.pipeline_mode<synchronous>, transform_indices = @transform_4, window_bounds = array<i64: 1, 128>}, {pipeline_mode = #tpu.pipeline_mode<synchronous>, transform_indices = @transform_5, window_bounds = array<i64: 2, 128>}]} {
    %c0 = arith.constant 0 : index
    %c0_0 = arith.constant 0 : index
    %0 = vector.load %arg2[%c0, %c0_0] : memref<32x64xbf16, #tpu.memory_space<vmem>>, vector<32x64xbf16>
    %c0_1 = arith.constant 0 : index
    %c0_2 = arith.constant 0 : index
    %1 = vector.load %arg3[%c0_1, %c0_2] : memref<1x64xf32, #tpu.memory_space<vmem>>, vector<1x64xf32>
    %c0_3 = arith.constant 0 : index
    %c0_4 = arith.constant 0 : index
    %c0_5 = arith.constant 0 : index
    %2 = vector.load %arg1[%c0_3, %c0_4, %c0_5] : memref<2x256x32xbf16, #tpu.memory_space<vmem>>, vector<1x256x32xbf16>
    %3 = vector.shape_cast %2 : vector<1x256x32xbf16> to vector<256x32xbf16>
    %cst = arith.constant dense<0.000000e+00> : vector<256x64xf32>
    %4 = tpu.matmul %3, %0, %cst {dimension_numbers = #tpu.dot_dimension_numbers<[1], [0], [0], [1], [0, 0, 1, 1], [], []>} : vector<256x32xbf16>, vector<32x64xbf16>, vector<256x64xf32> -> vector<256x64xf32>
    %5 = vector.broadcast %1 : vector<1x64xf32> to vector<256x64xf32>
    %6 = arith.addf %4, %5 : vector<256x64xf32>
    %cst_6 = arith.constant 0.000000e+00 : f32
    %7 = vector.broadcast %cst_6 : f32 to vector<256x64xf32>
    %8 = arith.maximumf %6, %7 : vector<256x64xf32>
    %cst_7 = arith.constant dense<0.000000e+00> : vector<64xf32>
    %9 = vector.multi_reduction <add>, %8, %cst_7 [0] : vector<256x64xf32> to vector<64xf32>
    %10 = vector.shape_cast %9 : vector<64xf32> to vector<1x64xf32>
    %cst_8 = arith.constant 3.906250e-03 : f32
    %11 = vector.broadcast %cst_8 : f32 to vector<1x64xf32>
    %12 = arith.mulf %10, %11 : vector<1x64xf32>
    %c1 = arith.constant 1 : index
    %c0_9 = arith.constant 0 : index
    %c0_10 = arith.constant 0 : index
    %13 = vector.load %arg1[%c1, %c0_9, %c0_10] : memref<2x256x32xbf16, #tpu.memory_space<vmem>>, vector<1x256x32xbf16>
    %14 = vector.shape_cast %13 : vector<1x256x32xbf16> to vector<256x32xbf16>
    %cst_11 = arith.constant dense<0.000000e+00> : vector<256x64xf32>
    %15 = tpu.matmul %14, %0, %cst_11 {dimension_numbers = #tpu.dot_dimension_numbers<[1], [0], [0], [1], [0, 0, 1, 1], [], []>} : vector<256x32xbf16>, vector<32x64xbf16>, vector<256x64xf32> -> vector<256x64xf32>
    %16 = vector.broadcast %1 : vector<1x64xf32> to vector<256x64xf32>
    %17 = arith.addf %15, %16 : vector<256x64xf32>
    %cst_12 = arith.constant 0.000000e+00 : f32
    %18 = vector.broadcast %cst_12 : f32 to vector<256x64xf32>
    %19 = arith.maximumf %17, %18 : vector<256x64xf32>
    %cst_13 = arith.constant dense<0.000000e+00> : vector<64xf32>
    %20 = vector.multi_reduction <add>, %19, %cst_13 [0] : vector<256x64xf32> to vector<64xf32>
    %21 = vector.shape_cast %20 : vector<64xf32> to vector<1x64xf32>
    %cst_14 = arith.constant 3.906250e-03 : f32
    %22 = vector.broadcast %cst_14 : f32 to vector<1x64xf32>
    %23 = arith.mulf %21, %22 : vector<1x64xf32>
    %24 = tpu.concatenate %12, %23 in 0 : vector<1x64xf32>, vector<1x64xf32> -> vector<2x64xf32>
    %c0_15 = arith.constant 0 : index
    %c0_16 = arith.constant 0 : index
    %25 = vector.load %arg4[%c0_15, %c0_16] : memref<64x128xf32, #tpu.memory_space<vmem>>, vector<64x128xf32>
    %cst_17 = arith.constant dense<0.000000e+00> : vector<2x128xf32>
    %26 = tpu.matmul %24, %25, %cst_17 {dimension_numbers = #tpu.dot_dimension_numbers<[1], [0], [0], [1], [0, 0, 1, 1], [], []>} : vector<2x64xf32>, vector<64x128xf32>, vector<2x128xf32> -> vector<2x128xf32>
    %c0_18 = arith.constant 0 : index
    %c0_19 = arith.constant 0 : index
    %27 = vector.load %arg5[%c0_18, %c0_19] : memref<1x128xf32, #tpu.memory_space<vmem>>, vector<1x128xf32>
    %28 = vector.broadcast %27 : vector<1x128xf32> to vector<2x128xf32>
    %29 = arith.addf %26, %28 : vector<2x128xf32>
    %c0_20 = arith.constant 0 : index
    %c0_21 = arith.constant 0 : index
    %30 = vector.load %arg6[%c0_20, %c0_21] : memref<2x128xf32, #tpu.memory_space<vmem>>, vector<2x128xf32>
    tpu.vector_store %arg6[%c0_20, %c0_21], %29 {strides = array<i32>} : memref<2x128xf32, #tpu.memory_space<vmem>>, vector<2x128xf32>,
    return
  }
  func.func @transform_0(%arg0: i32) -> (i32, i32, i32) {
    %c0_i32 = arith.constant 0 : i32
    %c0_i32_0 = arith.constant 0 : i32
    %c0_i32_1 = arith.constant 0 : i32
    %c0_i32_2 = arith.constant 0 : i32
    return %c0_i32, %c0_i32_0, %c0_i32_1 : i32, i32, i32
  }
  func.func @transform_1(%arg0: i32) -> (i32, i32) {
    %c0_i32 = arith.constant 0 : i32
    %c0_i32_0 = arith.constant 0 : i32
    %c0_i32_1 = arith.constant 0 : i32
    return %c0_i32, %c0_i32_0 : i32, i32
  }
  func.func @transform_2(%arg0: i32) -> (i32, i32) {
    %c0_i32 = arith.constant 0 : i32
    %c0_i32_0 = arith.constant 0 : i32
    %c0_i32_1 = arith.constant 0 : i32
    return %c0_i32, %c0_i32_0 : i32, i32
  }
  func.func @transform_3(%arg0: i32) -> (i32, i32) {
    %c0_i32 = arith.constant 0 : i32
    %c0_i32_0 = arith.constant 0 : i32
    %c0_i32_1 = arith.constant 0 : i32
    return %c0_i32, %c0_i32_0 : i32, i32
  }
  func.func @transform_4(%arg0: i32) -> (i32, i32) {
    %c0_i32 = arith.constant 0 : i32
    %c0_i32_0 = arith.constant 0 : i32
    %c0_i32_1 = arith.constant 0 : i32
    return %c0_i32, %c0_i32_0 : i32, i32
  }
  func.func @transform_5(%arg0: i32) -> (i32, i32) {
    %c0_i32 = arith.constant 0 : i32
    %c0_i32_0 = arith.constant 0 : i32
    %c0_i32_1 = arith.constant 0 : i32
    return %c0_i32, %c0_i32_0 : i32, i32
  }
}

</mosaic_0001>

<llo_original>
// kernel: tpu_custom_call.1
$region0: #{tpu_custom_call.1}
  #allocation0 [shape = 'u32[]', space=smem, size = 0x4, offset = 0x4, fixed_abs, tag = 'smem constant byte address 0x4 - core index']
  #allocation1 [shape = 'u32[144,128]{1,0:T(1,128)}', space=vmem, size = 0x12000, scoped, tag = 'internal scratch']
  %s0 = inlined_call_operand.vmem [shape: bf16[2,256,32], index: 0, kind: input, shape index: {}]
  %s1 = inlined_call_operand.vmem [shape: bf16[32,64], index: 1, kind: input, shape index: {}]
  %s2 = inlined_call_operand.vmem [shape: f32[1,64], index: 2, kind: input, shape index: {}]
  %s3 = inlined_call_operand.vmem [shape: f32[64,128], index: 3, kind: input, shape index: {}]
  %s4 = inlined_call_operand.vmem [shape: f32[1,128], index: 4, kind: input, shape index: {}]
  %s5 = inlined_call_operand.hbm [shape: f32[2,128], index: 5, kind: output, shape index: {}]
  %s6 = sld [smem:[#allocation0]]
  $region30: #{tpu_custom_call.1} parent=0
    _
  %s8 = ssub.s32 1, %s6
  %s9 = scalar_select 0, %s8, %s6
  $region1: #{tpu_custom_call.1} parent=0
    #allocation2 [shape = 'u8[1024]{0}', space=vmem, size = 0x400, scoped, tag = 'output window, operand 0, single buffered']
    #allocation3 [shape = 's32[1]{0}', space=sflag, size = 0x4, scoped, tag = 'scoped memory for tpu_custom_call.1']
    %10 = vsyncpa [#allocation3], 0
    // Predicated region
    $region2: #{tpu_custom_call.1} parent=1 // pred_check
      _
    $region3: #{tpu_custom_call.1} parent=1 // pred_check_branch
      %12 = sbr.rel (0) target = $region5
    $region4: #{tpu_custom_call.1} parent=1 // pred_region
      _
    $region5: #{tpu_custom_call.1} parent=1 // pred_fallthru
      _
    // Predicated region
    $region6: #{tpu_custom_call.1} parent=1 // pred_check
      _
    $region7: #{tpu_custom_call.1} parent=1 // pred_check_branch
      %14 = sbr.rel (0) target = $region9
    $region8: #{tpu_custom_call.1} parent=1 // pred_region
      _
    $region9: #{tpu_custom_call.1} parent=1 // pred_fallthru
      _
    // Predicated region
    $region10: #{tpu_custom_call.1} parent=1 // pred_check
      _
    $region11: #{tpu_custom_call.1} parent=1 // pred_check_branch
      %16 = sbr.rel (0) target = $region13
    $region12: #{tpu_custom_call.1} parent=1 // pred_region
      _
    $region13: #{tpu_custom_call.1} parent=1 // pred_fallthru
      _
    // Predicated region
    $region14: #{tpu_custom_call.1} parent=1 // pred_check
      _
    $region15: #{tpu_custom_call.1} parent=1 // pred_check_branch
      %18 = sbr.rel (0) target = $region17
    $region16: #{tpu_custom_call.1} parent=1 // pred_region
      _
    $region17: #{tpu_custom_call.1} parent=1 // pred_fallthru
      _
    // Predicated region
    $region18: #{tpu_custom_call.1} parent=1 // pred_check
      _
    $region19: #{tpu_custom_call.1} parent=1 // pred_check_branch
      %20 = sbr.rel (0) target = $region21
    $region20: #{tpu_custom_call.1} parent=1 // pred_region
      _
    $region21: #{tpu_custom_call.1} parent=1 // pred_fallthru
      _
    %v22 = vld [vmem:[%s1] sm:$0xf]
    %v23 = vld [vmem:[%s1 + $0x4] sm:$0xf]
    %v24 = vld [vmem:[%s1 + $0x8] sm:$0xf]
    %v25 = vld [vmem:[%s1 + $0xc] sm:$0xf]
    %v26 = vld [vmem:[%s2] sm:$0x1]
    %v27 = vld [vmem:[%s0] sm:$0xf]
    %v28 = vld [vmem:[%s0 + $0x4] sm:$0xf]
    %v29 = vld [vmem:[%s0 + $0x8] sm:$0xf]
    %v30 = vld [vmem:[%s0 + $0xc] sm:$0xf]
    %v31 = vld [vmem:[%s0 + $0x10] sm:$0xf]
    %v32 = vld [vmem:[%s0 + $0x14] sm:$0xf]
    %v33 = vld [vmem:[%s0 + $0x18] sm:$0xf]
    %v34 = vld [vmem:[%s0 + $0x1c] sm:$0xf]
    %v35 = vld [vmem:[%s0 + $0x20] sm:$0xf]
    %v36 = vld [vmem:[%s0 + $0x24] sm:$0xf]
    %v37 = vld [vmem:[%s0 + $0x28] sm:$0xf]
    %v38 = vld [vmem:[%s0 + $0x2c] sm:$0xf]
    %v39 = vld [vmem:[%s0 + $0x30] sm:$0xf]
    %v40 = vld [vmem:[%s0 + $0x34] sm:$0xf]
    %v41 = vld [vmem:[%s0 + $0x38] sm:$0xf]
    %v42 = vld [vmem:[%s0 + $0x3c] sm:$0xf]
    %v43 = vld [vmem:[%s0 + $0x40] sm:$0xf]
    %v44 = vld [vmem:[%s0 + $0x44] sm:$0xf]
    %v45 = vld [vmem:[%s0 + $0x48] sm:$0xf]
    %v46 = vld [vmem:[%s0 + $0x4c] sm:$0xf]
    %v47 = vld [vmem:[%s0 + $0x50] sm:$0xf]
    %v48 = vld [vmem:[%s0 + $0x54] sm:$0xf]
    %v49 = vld [vmem:[%s0 + $0x58] sm:$0xf]
    %v50 = vld [vmem:[%s0 + $0x5c] sm:$0xf]
    %v51 = vld [vmem:[%s0 + $0x60] sm:$0xf]
    %v52 = vld [vmem:[%s0 + $0x64] sm:$0xf]
    %v53 = vld [vmem:[%s0 + $0x68] sm:$0xf]
    %v54 = vld [vmem:[%s0 + $0x6c] sm:$0xf]
    %v55 = vld [vmem:[%s0 + $0x70] sm:$0xf]
    %v56 = vld [vmem:[%s0 + $0x74] sm:$0xf]
    %v57 = vld [vmem:[%s0 + $0x78] sm:$0xf]
    %v58 = vld [vmem:[%s0 + $0x7c] sm:$0xf]
    %v60 = vlaneseq
    %v61 = vshrl.u32 %v60, 7
    %v62 = vsub.s32 0, %v61
    %v63 = vrot.slane %v26, %v62
    %v97 = vunpack.c.l.b16 %v27
    %v98 = vunpack.c.l.b16 %v28
    %v99 = vunpack.c.l.b16 %v29
    %v100 = vunpack.c.l.b16 %v30
    %v101 = vunpack.c.l.b16 %v31
    %v102 = vunpack.c.l.b16 %v32
    %v103 = vunpack.c.l.b16 %v33
    %v104 = vunpack.c.l.b16 %v34
    %v105 = vunpack.c.l.b16 %v35
    %v106 = vunpack.c.l.b16 %v36
    %v107 = vunpack.c.l.b16 %v37
    %v108 = vunpack.c.l.b16 %v38
    %v109 = vunpack.c.l.b16 %v39
    %v110 = vunpack.c.l.b16 %v40
    %v111 = vunpack.c.l.b16 %v41
    %v112 = vunpack.c.l.b16 %v42
    %v113 = vunpack.c.l.b16 %v43
    %v114 = vunpack.c.l.b16 %v44
    %v115 = vunpack.c.l.b16 %v45
    %v116 = vunpack.c.l.b16 %v46
    %v117 = vunpack.c.l.b16 %v47
    %v118 = vunpack.c.l.b16 %v48
    %v119 = vunpack.c.l.b16 %v49
    %v120 = vunpack.c.l.b16 %v50
    %v121 = vunpack.c.l.b16 %v51
    %v122 = vunpack.c.l.b16 %v52
    %v123 = vunpack.c.l.b16 %v53
    %v124 = vunpack.c.l.b16 %v54
    %v125 = vunpack.c.l.b16 %v55
    %v126 = vunpack.c.l.b16 %v56
    %v127 = vunpack.c.l.b16 %v57
    %v128 = vunpack.c.l.b16 %v58
    %v129 = vpack.c.b16 %v98, %v97
    %v130 = vpack.c.b16 %v100, %v99
    %v131 = vpack.c.b16 %v102, %v101
    %v132 = vpack.c.b16 %v104, %v103
    %v133 = vpack.c.b16 %v106, %v105
    %v134 = vpack.c.b16 %v108, %v107
    %v135 = vpack.c.b16 %v110, %v109
    %v136 = vpack.c.b16 %v112, %v111
    %v137 = vpack.c.b16 %v114, %v113
    %v138 = vpack.c.b16 %v116, %v115
    %v139 = vpack.c.b16 %v118, %v117
    %v140 = vpack.c.b16 %v120, %v119
    %v141 = vpack.c.b16 %v122, %v121
    %v142 = vpack.c.b16 %v124, %v123
    %v143 = vpack.c.b16 %v126, %v125
    %v144 = vpack.c.b16 %v128, %v127
    %v149 = vunpack.c.l.b16 %v22
    %v150 = vunpack.c.l.b16 %v23
    %v151 = vunpack.c.l.b16 %v24
    %v152 = vunpack.c.l.b16 %v25
    %v153 = vpack.c.b16 %v150, %v149
    %v154 = vpack.c.b16 %v152, %v151
    %vm157 = vcmask 261120
    %v159 = vsel %vm157, %v129, 0
    %v162 = vsel %vm157, %v130, 0
    %v165 = vsel %vm157, %v131, 0
    %v168 = vsel %vm157, %v132, 0
    %v171 = vsel %vm157, %v133, 0
    %v174 = vsel %vm157, %v134, 0
    %v177 = vsel %vm157, %v135, 0
    %v180 = vsel %vm157, %v136, 0
    %v183 = vsel %vm157, %v137, 0
    %v186 = vsel %vm157, %v138, 0
    %v189 = vsel %vm157, %v139, 0
    %v192 = vsel %vm157, %v140, 0
    %v195 = vsel %vm157, %v141, 0
    %v198 = vsel %vm157, %v142, 0
    %v201 = vsel %vm157, %v143, 0
    %v204 = vsel %vm157, %v144, 0
    %206 = vmatprep.subr.bf16.mxu0 0
    %207 = vmatpush1.bf16.msra.mxu0 0
    %208 = vmatprep.subr.bf16.mxu0 0
    %209 = vmatpush1.bf16.msra.mxu0 0
    %210 = vmatprep.subr.bf16.mxu0 0
    %211 = vmatpush1.bf16.msra.mxu0 0
    %212 = vmatprep.subr.bf16.mxu0 0
    %213 = vmatpush1.bf16.msra.mxu0 0
    %214 = vmatprep.subr.bf16.mxu0 0
    %215 = vmatpush1.bf16.msra.mxu0 0
    %216 = vmatprep.subr.bf16.mxu0 0
    %217 = vmatpush1.bf16.msra.mxu0 0
    %218 = vmatprep.subr.bf16.mxu0 0
    %219 = vmatpush1.bf16.msra.mxu0 %v154
    %220 = vmatprep.subr.bf16.mxu0 0
    %221 = vmatpush1.bf16.msra.mxu0 %v153
    %222 = vmatprep.subr.bf16.mxu0 0
    %223 = vmatpush2.bf16.msra.mxu0 0
    %224 = vmatprep.subr.bf16.mxu0 0
    %225 = vmatpush2.bf16.msra.mxu0 0
    %226 = vmatprep.subr.bf16.mxu0 0
    %227 = vmatpush2.bf16.msra.mxu0 0
    %228 = vmatprep.subr.bf16.mxu0 0
    %229 = vmatpush2.bf16.msra.mxu0 0
    %230 = vmatprep.subr.bf16.mxu0 0
    %231 = vmatpush2.bf16.msra.mxu0 0
    %232 = vmatprep.subr.bf16.mxu0 0
    %233 = vmatpush2.bf16.msra.mxu0 0
    %234 = vmatprep.subr.bf16.mxu0 0
    %235 = vmatpush2.bf16.msra.mxu0 0
    %236 = vmatprep.subr.bf16.mxu0 0
    %237 = vmatpush2.bf16.msra.mxu0 0
    %238 = vmatprep.mubr.bf16.mxu0 0
    %239 = vmatmul.mubr.bf16.gmra.mxu0 %v159
    %v240 = vpop.f32.mrf.mxu0
    %v241 = vadd.f32 %v63, %v240
    %v242 = vpop.f32.mrf.mxu0
    %v243 = vpop.f32.mrf.mxu0
    %v244 = vadd.f32 %v63, %v243
    %v245 = vpop.f32.mrf.mxu0
    %246 = vmatprep.mubr.bf16.mxu0 0
    %247 = vmatmul.mubr.bf16.gmra.mxu0 %v162
    %v248 = vpop.f32.mrf.mxu0
    %v249 = vadd.f32 %v63, %v248
    %v250 = vpop.f32.mrf.mxu0
    %v251 = vpop.f32.mrf.mxu0
    %v252 = vadd.f32 %v63, %v251
    %v253 = vpop.f32.mrf.mxu0
    %254 = vmatprep.mubr.bf16.mxu0 0
    %255 = vmatmul.mubr.bf16.gmra.mxu0 %v165
    %v256 = vpop.f32.mrf.mxu0
    %v257 = vadd.f32 %v63, %v256
    %v258 = vpop.f32.mrf.mxu0
    %v259 = vpop.f32.mrf.mxu0
    %v260 = vadd.f32 %v63, %v259
    %v261 = vpop.f32.mrf.mxu0
    %262 = vmatprep.mubr.bf16.mxu0 0
    %263 = vmatmul.mubr.bf16.gmra.mxu0 %v168
    %v264 = vpop.f32.mrf.mxu0
    %v265 = vadd.f32 %v63, %v264
    %v266 = vpop.f32.mrf.mxu0
    %v267 = vpop.f32.mrf.mxu0
    %v268 = vadd.f32 %v63, %v267
    %v269 = vpop.f32.mrf.mxu0
    %270 = vmatprep.mubr.bf16.mxu0 0
    %271 = vmatmul.mubr.bf16.gmra.mxu0 %v171
    %v272 = vpop.f32.mrf.mxu0
    %v273 = vadd.f32 %v63, %v272
    %v274 = vpop.f32.mrf.mxu0
    %v275 = vpop.f32.mrf.mxu0
    %v276 = vadd.f32 %v63, %v275
    %v277 = vpop.f32.mrf.mxu0
    %278 = vmatprep.mubr.bf16.mxu0 0
    %279 = vmatmul.mubr.bf16.gmra.mxu0 %v174
    %v280 = vpop.f32.mrf.mxu0
    %v281 = vadd.f32 %v63, %v280
    %v282 = vpop.f32.mrf.mxu0
    %v283 = vpop.f32.mrf.mxu0
    %v284 = vadd.f32 %v63, %v283
    %v285 = vpop.f32.mrf.mxu0
    %286 = vmatprep.mubr.bf16.mxu0 0
    %287 = vmatmul.mubr.bf16.gmra.mxu0 %v177
    %v288 = vpop.f32.mrf.mxu0
    %v289 = vadd.f32 %v63, %v288
    %v290 = vpop.f32.mrf.mxu0
    %v291 = vpop.f32.mrf.mxu0
    %v292 = vadd.f32 %v63, %v291
    %v293 = vpop.f32.mrf.mxu0
    %294 = vmatprep.mubr.bf16.mxu0 0
    %295 = vmatmul.mubr.bf16.gmra.mxu0 %v180
    %v296 = vpop.f32.mrf.mxu0
    %v297 = vadd.f32 %v63, %v296
    %v298 = vpop.f32.mrf.mxu0
    %v299 = vpop.f32.mrf.mxu0
    %v300 = vadd.f32 %v63, %v299
    %v301 = vpop.f32.mrf.mxu0
    %302 = vmatprep.mubr.bf16.mxu0 0
    %303 = vmatmul.mubr.bf16.gmra.mxu0 %v183
    %v304 = vpop.f32.mrf.mxu0
    %v305 = vadd.f32 %v63, %v304
    %v306 = vpop.f32.mrf.mxu0
    %v307 = vpop.f32.mrf.mxu0
    %v308 = vadd.f32 %v63, %v307
    %v309 = vpop.f32.mrf.mxu0
    %310 = vmatprep.mubr.bf16.mxu0 0
    %311 = vmatmul.mubr.bf16.gmra.mxu0 %v186
    %v312 = vpop.f32.mrf.mxu0
    %v313 = vadd.f32 %v63, %v312
    %v314 = vpop.f32.mrf.mxu0
    %v315 = vpop.f32.mrf.mxu0
    %v316 = vadd.f32 %v63, %v315
    %v317 = vpop.f32.mrf.mxu0
    %318 = vmatprep.mubr.bf16.mxu0 0
    %319 = vmatmul.mubr.bf16.gmra.mxu0 %v189
    %v320 = vpop.f32.mrf.mxu0
    %v321 = vadd.f32 %v63, %v320
    %v322 = vpop.f32.mrf.mxu0
    %v323 = vpop.f32.mrf.mxu0
    %v324 = vadd.f32 %v63, %v323
    %v325 = vpop.f32.mrf.mxu0
    %326 = vmatprep.mubr.bf16.mxu0 0
    %327 = vmatmul.mubr.bf16.gmra.mxu0 %v192
    %v328 = vpop.f32.mrf.mxu0
    %v329 = vadd.f32 %v63, %v328
    %v330 = vpop.f32.mrf.mxu0
    %v331 = vpop.f32.mrf.mxu0
    %v332 = vadd.f32 %v63, %v331
    %v333 = vpop.f32.mrf.mxu0
    %334 = vmatprep.mubr.bf16.mxu0 0
    %335 = vmatmul.mubr.bf16.gmra.mxu0 %v195
    %v336 = vpop.f32.mrf.mxu0
    %v337 = vadd.f32 %v63, %v336
    %v338 = vpop.f32.mrf.mxu0
    %v339 = vpop.f32.mrf.mxu0
    %v340 = vadd.f32 %v63, %v339
    %v341 = vpop.f32.mrf.mxu0
    %342 = vmatprep.mubr.bf16.mxu0 0
    %343 = vmatmul.mubr.bf16.gmra.mxu0 %v198
    %v344 = vpop.f32.mrf.mxu0
    %v345 = vadd.f32 %v63, %v344
    %v346 = vpop.f32.mrf.mxu0
    %v347 = vpop.f32.mrf.mxu0
    %v348 = vadd.f32 %v63, %v347
    %v349 = vpop.f32.mrf.mxu0
    %350 = vmatprep.mubr.bf16.mxu0 0
    %351 = vmatmul.mubr.bf16.gmra.mxu0 %v201
    %v352 = vpop.f32.mrf.mxu0
    %v353 = vadd.f32 %v63, %v352
    %v354 = vpop.f32.mrf.mxu0
    %v355 = vpop.f32.mrf.mxu0
    %v356 = vadd.f32 %v63, %v355
    %v357 = vpop.f32.mrf.mxu0
    %358 = vmatprep.mubr.bf16.mxu0 0
    %359 = vmatmul.mubr.bf16.gmra.mxu0 %v204
    %v360 = vpop.f32.mrf.mxu0
    %v361 = vadd.f32 %v63, %v360
    %v362 = vpop.f32.mrf.mxu0
    %v363 = vpop.f32.mrf.mxu0
    %v364 = vadd.f32 %v63, %v363
    %v365 = vpop.f32.mrf.mxu0
    %366 = vdwg.mxu0
    %v367 = vmax.f32 %v241, 0.0
    %v368 = vmax.f32 %v244, 0.0
    %v369 = vmax.f32 %v249, 0.0
    %v370 = vmax.f32 %v252, 0.0
    %v371 = vmax.f32 %v257, 0.0
    %v372 = vmax.f32 %v260, 0.0
    %v373 = vmax.f32 %v265, 0.0
    %v374 = vmax.f32 %v268, 0.0
    %v375 = vmax.f32 %v273, 0.0
    %v376 = vmax.f32 %v276, 0.0
    %v377 = vmax.f32 %v281, 0.0
    %v378 = vmax.f32 %v284, 0.0
    %v379 = vmax.f32 %v289, 0.0
    %v380 = vmax.f32 %v292, 0.0
    %v381 = vmax.f32 %v297, 0.0
    %v382 = vmax.f32 %v300, 0.0
    %v383 = vmax.f32 %v305, 0.0
    %v384 = vmax.f32 %v308, 0.0
    %v385 = vmax.f32 %v313, 0.0
    %v386 = vmax.f32 %v316, 0.0
    %v387 = vmax.f32 %v321, 0.0
    %v388 = vmax.f32 %v324, 0.0
    %v389 = vmax.f32 %v329, 0.0
    %v390 = vmax.f32 %v332, 0.0
    %v391 = vmax.f32 %v337, 0.0
    %v392 = vmax.f32 %v340, 0.0
    %v393 = vmax.f32 %v345, 0.0
    %v394 = vmax.f32 %v348, 0.0
    %v395 = vmax.f32 %v353, 0.0
    %v396 = vmax.f32 %v356, 0.0
    %v397 = vmax.f32 %v361, 0.0
    %v398 = vmax.f32 %v364, 0.0
    %vm399 = vcmask 523264
    %v400 = vsel %vm399, %v367, 0.0
    %v401 = vsel %vm399, %v368, 0.0
    %v402 = vadd.f32 %v400, %v401
    %v403 = vsel %vm399, %v369, 0.0
    %v404 = vadd.f32 %v402, %v403
    %v405 = vsel %vm399, %v370, 0.0
    %v406 = vadd.f32 %v404, %v405
    %v407 = vsel %vm399, %v371, 0.0
    %v408 = vadd.f32 %v406, %v407
    %v409 = vsel %vm399, %v372, 0.0
    %v410 = vadd.f32 %v408, %v409
    %v411 = vsel %vm399, %v373, 0.0
    %v412 = vadd.f32 %v410, %v411
    %v413 = vsel %vm399, %v374, 0.0
    %v414 = vadd.f32 %v412, %v413
    %v415 = vsel %vm399, %v375, 0.0
    %v416 = vadd.f32 %v414, %v415
    %v417 = vsel %vm399, %v376, 0.0
    %v418 = vadd.f32 %v416, %v417
    %v419 = vsel %vm399, %v377, 0.0
    %v420 = vadd.f32 %v418, %v419
    %v421 = vsel %vm399, %v378, 0.0
    %v422 = vadd.f32 %v420, %v421
    %v423 = vsel %vm399, %v379, 0.0
    %v424 = vadd.f32 %v422, %v423
    %v425 = vsel %vm399, %v380, 0.0
    %v426 = vadd.f32 %v424, %v425
    %v427 = vsel %vm399, %v381, 0.0
    %v428 = vadd.f32 %v426, %v427
    %v429 = vsel %vm399, %v382, 0.0
    %v430 = vadd.f32 %v428, %v429
    %v431 = vsel %vm399, %v383, 0.0
    %v432 = vadd.f32 %v430, %v431
    %v433 = vsel %vm399, %v384, 0.0
    %v434 = vadd.f32 %v432, %v433
    %v435 = vsel %vm399, %v385, 0.0
    %v436 = vadd.f32 %v434, %v435
    %v437 = vsel %vm399, %v386, 0.0
    %v438 = vadd.f32 %v436, %v437
    %v439 = vsel %vm399, %v387, 0.0
    %v440 = vadd.f32 %v438, %v439
    %v441 = vsel %vm399, %v388, 0.0
    %v442 = vadd.f32 %v440, %v441
    %v443 = vsel %vm399, %v389, 0.0
    %v444 = vadd.f32 %v442, %v443
    %v445 = vsel %vm399, %v390, 0.0
    %v446 = vadd.f32 %v444, %v445
    %v447 = vsel %vm399, %v391, 0.0
    %v448 = vadd.f32 %v446, %v447
    %v449 = vsel %vm399, %v392, 0.0
    %v450 = vadd.f32 %v448, %v449
    %v451 = vsel %vm399, %v393, 0.0
    %v452 = vadd.f32 %v450, %v451
    %v453 = vsel %vm399, %v394, 0.0
    %v454 = vadd.f32 %v452, %v453
    %v455 = vsel %vm399, %v395, 0.0
    %v456 = vadd.f32 %v454, %v455
    %v457 = vsel %vm399, %v396, 0.0
    %v458 = vadd.f32 %v456, %v457
    %v459 = vsel %vm399, %v397, 0.0
    %v460 = vadd.f32 %v458, %v459
    %v461 = vsel %vm399, %v398, 0.0
    %v462 = vadd.f32 %v460, %v461
    %v463 = vrot.slane %v462, 4
    %v464 = vadd.f32 %v462, %v463
    %v465 = vrot.slane %v464, 2
    %v466 = vadd.f32 %v464, %v465
    %v467 = vrot.slane %v466, 1
    %v468 = vadd.f32 %v466, %v467
    %v469 = vmul.f32 %v468, 0.00390625
    %s470 = scalar_lea.vmem %s0, 128
    %v471 = vld [vmem:[%s470] sm:$0xf]
    %v472 = vld [vmem:[%s470 + $0x4] sm:$0xf]
    %v473 = vld [vmem:[%s470 + $0x8] sm:$0xf]
    %v474 = vld [vmem:[%s470 + $0xc] sm:$0xf]
    %v475 = vld [vmem:[%s470 + $0x10] sm:$0xf]
    %v476 = vld [vmem:[%s470 + $0x14] sm:$0xf]
    %v477 = vld [vmem:[%s470 + $0x18] sm:$0xf]
    %v478 = vld [vmem:[%s470 + $0x1c] sm:$0xf]
    %v479 = vld [vmem:[%s470 + $0x20] sm:$0xf]
    %v480 = vld [vmem:[%s470 + $0x24] sm:$0xf]
    %v481 = vld [vmem:[%s470 + $0x28] sm:$0xf]
    %v482 = vld [vmem:[%s470 + $0x2c] sm:$0xf]
    %v483 = vld [vmem:[%s470 + $0x30] sm:$0xf]
    %v484 = vld [vmem:[%s470 + $0x34] sm:$0xf]
    %v485 = vld [vmem:[%s470 + $0x38] sm:$0xf]
    %v486 = vld [vmem:[%s470 + $0x3c] sm:$0xf]
    %v487 = vld [vmem:[%s470 + $0x40] sm:$0xf]
    %v488 = vld [vmem:[%s470 + $0x44] sm:$0xf]
    %v489 = vld [vmem:[%s470 + $0x48] sm:$0xf]
    %v490 = vld [vmem:[%s470 + $0x4c] sm:$0xf]
    %v491 = vld [vmem:[%s470 + $0x50] sm:$0xf]
    %v492 = vld [vmem:[%s470 + $0x54] sm:$0xf]
    %v493 = vld [vmem:[%s470 + $0x58] sm:$0xf]
    %v494 = vld [vmem:[%s470 + $0x5c] sm:$0xf]
    %v495 = vld [vmem:[%s470 + $0x60] sm:$0xf]
    %v496 = vld [vmem:[%s470 + $0x64] sm:$0xf]
    %v497 = vld [vmem:[%s470 + $0x68] sm:$0xf]
    %v498 = vld [vmem:[%s470 + $0x6c] sm:$0xf]
    %v499 = vld [vmem:[%s470 + $0x70] sm:$0xf]
    %v500 = vld [vmem:[%s470 + $0x74] sm:$0xf]
    %v501 = vld [vmem:[%s470 + $0x78] sm:$0xf]
    %v502 = vld [vmem:[%s470 + $0x7c] sm:$0xf]
    %v535 = vunpack.c.l.b16 %v471
    %v536 = vunpack.c.l.b16 %v472
    %v537 = vunpack.c.l.b16 %v473
    %v538 = vunpack.c.l.b16 %v474
    %v539 = vunpack.c.l.b16 %v475
    %v540 = vunpack.c.l.b16 %v476
    %v541 = vunpack.c.l.b16 %v477
    %v542 = vunpack.c.l.b16 %v478
    %v543 = vunpack.c.l.b16 %v479
    %v544 = vunpack.c.l.b16 %v480
    %v545 = vunpack.c.l.b16 %v481
    %v546 = vunpack.c.l.b16 %v482
    %v547 = vunpack.c.l.b16 %v483
    %v548 = vunpack.c.l.b16 %v484
    %v549 = vunpack.c.l.b16 %v485
    %v550 = vunpack.c.l.b16 %v486
    %v551 = vunpack.c.l.b16 %v487
    %v552 = vunpack.c.l.b16 %v488
    %v553 = vunpack.c.l.b16 %v489
    %v554 = vunpack.c.l.b16 %v490
    %v555 = vunpack.c.l.b16 %v491
    %v556 = vunpack.c.l.b16 %v492
    %v557 = vunpack.c.l.b16 %v493
    %v558 = vunpack.c.l.b16 %v494
    %v559 = vunpack.c.l.b16 %v495
    %v560 = vunpack.c.l.b16 %v496
    %v561 = vunpack.c.l.b16 %v497
    %v562 = vunpack.c.l.b16 %v498
    %v563 = vunpack.c.l.b16 %v499
    %v564 = vunpack.c.l.b16 %v500
    %v565 = vunpack.c.l.b16 %v501
    %v566 = vunpack.c.l.b16 %v502
    %v567 = vpack.c.b16 %v536, %v535
    %v568 = vpack.c.b16 %v538, %v537
    %v569 = vpack.c.b16 %v540, %v539
    %v570 = vpack.c.b16 %v542, %v541
    %v571 = vpack.c.b16 %v544, %v543
    %v572 = vpack.c.b16 %v546, %v545
    %v573 = vpack.c.b16 %v548, %v547
    %v574 = vpack.c.b16 %v550, %v549
    %v575 = vpack.c.b16 %v552, %v551
    %v576 = vpack.c.b16 %v554, %v553
    %v577 = vpack.c.b16 %v556, %v555
    %v578 = vpack.c.b16 %v558, %v557
    %v579 = vpack.c.b16 %v560, %v559
    %v580 = vpack.c.b16 %v562, %v561
    %v581 = vpack.c.b16 %v564, %v563
    %v582 = vpack.c.b16 %v566, %v565
    %v584 = vsel %vm157, %v567, 0
    %v587 = vsel %vm157, %v568, 0
    %v590 = vsel %vm157, %v569, 0
    %v593 = vsel %vm157, %v570, 0
    %v596 = vsel %vm157, %v571, 0
    %v599 = vsel %vm157, %v572, 0
    %v602 = vsel %vm157, %v573, 0
    %v605 = vsel %vm157, %v574, 0
    %v608 = vsel %vm157, %v575, 0
    %v611 = vsel %vm157, %v576, 0
    %v614 = vsel %vm157, %v577, 0
    %v617 = vsel %vm157, %v578, 0
    %v620 = vsel %vm157, %v579, 0
    %v623 = vsel %vm157, %v580, 0
    %v626 = vsel %vm157, %v581, 0
    %v629 = vsel %vm157, %v582, 0
    %631 = vmatprep.subr.bf16.mxu0 0
    %632 = vmatpush1.bf16.msra.mxu0 0
    %633 = vmatprep.subr.bf16.mxu0 0
    %634 = vmatpush1.bf16.msra.mxu0 0
    %635 = vmatprep.subr.bf16.mxu0 0
    %636 = vmatpush1.bf16.msra.mxu0 0
    %637 = vmatprep.subr.bf16.mxu0 0
    %638 = vmatpush1.bf16.msra.mxu0 0
    %639 = vmatprep.subr.bf16.mxu0 0
    %640 = vmatpush1.bf16.msra.mxu0 0
    %641 = vmatprep.subr.bf16.mxu0 0
    %642 = vmatpush1.bf16.msra.mxu0 0
    %643 = vmatprep.subr.bf16.mxu0 0
    %644 = vmatpush1.bf16.msra.mxu0 %v154
    %645 = vmatprep.subr.bf16.mxu0 0
    %646 = vmatpush1.bf16.msra.mxu0 %v153
    %647 = vmatprep.subr.bf16.mxu0 0
    %648 = vmatpush2.bf16.msra.mxu0 0
    %649 = vmatprep.subr.bf16.mxu0 0
    %650 = vmatpush2.bf16.msra.mxu0 0
    %651 = vmatprep.subr.bf16.mxu0 0
    %652 = vmatpush2.bf16.msra.mxu0 0
    %653 = vmatprep.subr.bf16.mxu0 0
    %654 = vmatpush2.bf16.msra.mxu0 0
    %655 = vmatprep.subr.bf16.mxu0 0
    %656 = vmatpush2.bf16.msra.mxu0 0
    %657 = vmatprep.subr.bf16.mxu0 0
    %658 = vmatpush2.bf16.msra.mxu0 0
    %659 = vmatprep.subr.bf16.mxu0 0
    %660 = vmatpush2.bf16.msra.mxu0 0
    %661 = vmatprep.subr.bf16.mxu0 0
    %662 = vmatpush2.bf16.msra.mxu0 0
    %663 = vmatprep.mubr.bf16.mxu0 0
    %664 = vmatmul.mubr.bf16.gmra.mxu0 %v584
    %v665 = vpop.f32.mrf.mxu0
    %v666 = vadd.f32 %v63, %v665
    %v667 = vpop.f32.mrf.mxu0
    %v668 = vpop.f32.mrf.mxu0
    %v669 = vadd.f32 %v63, %v668
    %v670 = vpop.f32.mrf.mxu0
    %671 = vmatprep.mubr.bf16.mxu0 0
    %672 = vmatmul.mubr.bf16.gmra.mxu0 %v587
    %v673 = vpop.f32.mrf.mxu0
    %v674 = vadd.f32 %v63, %v673
    %v675 = vpop.f32.mrf.mxu0
    %v676 = vpop.f32.mrf.mxu0
    %v677 = vadd.f32 %v63, %v676
    %v678 = vpop.f32.mrf.mxu0
    %679 = vmatprep.mubr.bf16.mxu0 0
    %680 = vmatmul.mubr.bf16.gmra.mxu0 %v590
    %v681 = vpop.f32.mrf.mxu0
    %v682 = vadd.f32 %v63, %v681
    %v683 = vpop.f32.mrf.mxu0
    %v684 = vpop.f32.mrf.mxu0
    %v685 = vadd.f32 %v63, %v684
    %v686 = vpop.f32.mrf.mxu0
    %687 = vmatprep.mubr.bf16.mxu0 0
    %688 = vmatmul.mubr.bf16.gmra.mxu0 %v593
    %v689 = vpop.f32.mrf.mxu0
    %v690 = vadd.f32 %v63, %v689
    %v691 = vpop.f32.mrf.mxu0
    %v692 = vpop.f32.mrf.mxu0
    %v693 = vadd.f32 %v63, %v692
    %v694 = vpop.f32.mrf.mxu0
    %695 = vmatprep.mubr.bf16.mxu0 0
    %696 = vmatmul.mubr.bf16.gmra.mxu0 %v596
    %v697 = vpop.f32.mrf.mxu0
    %v698 = vadd.f32 %v63, %v697
    %v699 = vpop.f32.mrf.mxu0
    %v700 = vpop.f32.mrf.mxu0
    %v701 = vadd.f32 %v63, %v700
    %v702 = vpop.f32.mrf.mxu0
    %703 = vmatprep.mubr.bf16.mxu0 0
    %704 = vmatmul.mubr.bf16.gmra.mxu0 %v599
    %v705 = vpop.f32.mrf.mxu0
    %v706 = vadd.f32 %v63, %v705
    %v707 = vpop.f32.mrf.mxu0
    %v708 = vpop.f32.mrf.mxu0
    %v709 = vadd.f32 %v63, %v708
    %v710 = vpop.f32.mrf.mxu0
    %711 = vmatprep.mubr.bf16.mxu0 0
    %712 = vmatmul.mubr.bf16.gmra.mxu0 %v602
    %v713 = vpop.f32.mrf.mxu0
    %v714 = vadd.f32 %v63, %v713
    %v715 = vpop.f32.mrf.mxu0
    %v716 = vpop.f32.mrf.mxu0
    %v717 = vadd.f32 %v63, %v716
    %v718 = vpop.f32.mrf.mxu0
    %719 = vmatprep.mubr.bf16.mxu0 0
    %720 = vmatmul.mubr.bf16.gmra.mxu0 %v605
    %v721 = vpop.f32.mrf.mxu0
    %v722 = vadd.f32 %v63, %v721
    %v723 = vpop.f32.mrf.mxu0
    %v724 = vpop.f32.mrf.mxu0
    %v725 = vadd.f32 %v63, %v724
    %v726 = vpop.f32.mrf.mxu0
    %727 = vmatprep.mubr.bf16.mxu0 0
    %728 = vmatmul.mubr.bf16.gmra.mxu0 %v608
    %v729 = vpop.f32.mrf.mxu0
    %v730 = vadd.f32 %v63, %v729
    %v731 = vpop.f32.mrf.mxu0
    %v732 = vpop.f32.mrf.mxu0
    %v733 = vadd.f32 %v63, %v732
    %v734 = vpop.f32.mrf.mxu0
    %735 = vmatprep.mubr.bf16.mxu0 0
    %736 = vmatmul.mubr.bf16.gmra.mxu0 %v611
    %v737 = vpop.f32.mrf.mxu0
    %v738 = vadd.f32 %v63, %v737
    %v739 = vpop.f32.mrf.mxu0
    %v740 = vpop.f32.mrf.mxu0
    %v741 = vadd.f32 %v63, %v740
    %v742 = vpop.f32.mrf.mxu0
    %743 = vmatprep.mubr.bf16.mxu0 0
    %744 = vmatmul.mubr.bf16.gmra.mxu0 %v614
    %v745 = vpop.f32.mrf.mxu0
    %v746 = vadd.f32 %v63, %v745
    %v747 = vpop.f32.mrf.mxu0
    %v748 = vpop.f32.mrf.mxu0
    %v749 = vadd.f32 %v63, %v748
    %v750 = vpop.f32.mrf.mxu0
    %751 = vmatprep.mubr.bf16.mxu0 0
    %752 = vmatmul.mubr.bf16.gmra.mxu0 %v617
    %v753 = vpop.f32.mrf.mxu0
    %v754 = vadd.f32 %v63, %v753
    %v755 = vpop.f32.mrf.mxu0
    %v756 = vpop.f32.mrf.mxu0
    %v757 = vadd.f32 %v63, %v756
    %v758 = vpop.f32.mrf.mxu0
    %759 = vmatprep.mubr.bf16.mxu0 0
    %760 = vmatmul.mubr.bf16.gmra.mxu0 %v620
    %v761 = vpop.f32.mrf.mxu0
    %v762 = vadd.f32 %v63, %v761
    %v763 = vpop.f32.mrf.mxu0
    %v764 = vpop.f32.mrf.mxu0
    %v765 = vadd.f32 %v63, %v764
    %v766 = vpop.f32.mrf.mxu0
    %767 = vmatprep.mubr.bf16.mxu0 0
    %768 = vmatmul.mubr.bf16.gmra.mxu0 %v623
    %v769 = vpop.f32.mrf.mxu0
    %v770 = vadd.f32 %v63, %v769
    %v771 = vpop.f32.mrf.mxu0
    %v772 = vpop.f32.mrf.mxu0
    %v773 = vadd.f32 %v63, %v772
    %v774 = vpop.f32.mrf.mxu0
    %775 = vmatprep.mubr.bf16.mxu0 0
    %776 = vmatmul.mubr.bf16.gmra.mxu0 %v626
    %v777 = vpop.f32.mrf.mxu0
    %v778 = vadd.f32 %v63, %v777
    %v779 = vpop.f32.mrf.mxu0
    %v780 = vpop.f32.mrf.mxu0
    %v781 = vadd.f32 %v63, %v780
    %v782 = vpop.f32.mrf.mxu0
    %783 = vmatprep.mubr.bf16.mxu0 0
    %784 = vmatmul.mubr.bf16.gmra.mxu0 %v629
    %v785 = vpop.f32.mrf.mxu0
    %v786 = vadd.f32 %v63, %v785
    %v787 = vpop.f32.mrf.mxu0
    %v788 = vpop.f32.mrf.mxu0
    %v789 = vadd.f32 %v63, %v788
    %v790 = vpop.f32.mrf.mxu0
    %791 = vdwg.mxu0
    %v792 = vmax.f32 %v666, 0.0
    %v793 = vmax.f32 %v669, 0.0
    %v794 = vmax.f32 %v674, 0.0
    %v795 = vmax.f32 %v677, 0.0
    %v796 = vmax.f32 %v682, 0.0
    %v797 = vmax.f32 %v685, 0.0
    %v798 = vmax.f32 %v690, 0.0
    %v799 = vmax.f32 %v693, 0.0
    %v800 = vmax.f32 %v698, 0.0
    %v801 = vmax.f32 %v701, 0.0
    %v802 = vmax.f32 %v706, 0.0
    %v803 = vmax.f32 %v709, 0.0
    %v804 = vmax.f32 %v714, 0.0
    %v805 = vmax.f32 %v717, 0.0
    %v806 = vmax.f32 %v722, 0.0
    %v807 = vmax.f32 %v725, 0.0
    %v808 = vmax.f32 %v730, 0.0
    %v809 = vmax.f32 %v733, 0.0
    %v810 = vmax.f32 %v738, 0.0
    %v811 = vmax.f32 %v741, 0.0
    %v812 = vmax.f32 %v746, 0.0
    %v813 = vmax.f32 %v749, 0.0
    %v814 = vmax.f32 %v754, 0.0
    %v815 = vmax.f32 %v757, 0.0
    %v816 = vmax.f32 %v762, 0.0
    %v817 = vmax.f32 %v765, 0.0
    %v818 = vmax.f32 %v770, 0.0
    %v819 = vmax.f32 %v773, 0.0
    %v820 = vmax.f32 %v778, 0.0
    %v821 = vmax.f32 %v781, 0.0
    %v822 = vmax.f32 %v786, 0.0
    %v823 = vmax.f32 %v789, 0.0
    %v824 = vsel %vm399, %v792, 0.0
    %v825 = vsel %vm399, %v793, 0.0
    %v826 = vadd.f32 %v824, %v825
    %v827 = vsel %vm399, %v794, 0.0
    %v828 = vadd.f32 %v826, %v827
    %v829 = vsel %vm399, %v795, 0.0
    %v830 = vadd.f32 %v828, %v829
    %v831 = vsel %vm399, %v796, 0.0
    %v832 = vadd.f32 %v830, %v831
    %v833 = vsel %vm399, %v797, 0.0
    %v834 = vadd.f32 %v832, %v833
    %v835 = vsel %vm399, %v798, 0.0
    %v836 = vadd.f32 %v834, %v835
    %v837 = vsel %vm399, %v799, 0.0
    %v838 = vadd.f32 %v836, %v837
    %v839 = vsel %vm399, %v800, 0.0
    %v840 = vadd.f32 %v838, %v839
    %v841 = vsel %vm399, %v801, 0.0
    %v842 = vadd.f32 %v840, %v841
    %v843 = vsel %vm399, %v802, 0.0
    %v844 = vadd.f32 %v842, %v843
    %v845 = vsel %vm399, %v803, 0.0
    %v846 = vadd.f32 %v844, %v845
    %v847 = vsel %vm399, %v804, 0.0
    %v848 = vadd.f32 %v846, %v847
    %v849 = vsel %vm399, %v805, 0.0
    %v850 = vadd.f32 %v848, %v849
    %v851 = vsel %vm399, %v806, 0.0
    %v852 = vadd.f32 %v850, %v851
    %v853 = vsel %vm399, %v807, 0.0
    %v854 = vadd.f32 %v852, %v853
    %v855 = vsel %vm399, %v808, 0.0
    %v856 = vadd.f32 %v854, %v855
    %v857 = vsel %vm399, %v809, 0.0
    %v858 = vadd.f32 %v856, %v857
    %v859 = vsel %vm399, %v810, 0.0
    %v860 = vadd.f32 %v858, %v859
    %v861 = vsel %vm399, %v811, 0.0
    %v862 = vadd.f32 %v860, %v861
    %v863 = vsel %vm399, %v812, 0.0
    %v864 = vadd.f32 %v862, %v863
    %v865 = vsel %vm399, %v813, 0.0
    %v866 = vadd.f32 %v864, %v865
    %v867 = vsel %vm399, %v814, 0.0
    %v868 = vadd.f32 %v866, %v867
    %v869 = vsel %vm399, %v815, 0.0
    %v870 = vadd.f32 %v868, %v869
    %v871 = vsel %vm399, %v816, 0.0
    %v872 = vadd.f32 %v870, %v871
    %v873 = vsel %vm399, %v817, 0.0
    %v874 = vadd.f32 %v872, %v873
    %v875 = vsel %vm399, %v818, 0.0
    %v876 = vadd.f32 %v874, %v875
    %v877 = vsel %vm399, %v819, 0.0
    %v878 = vadd.f32 %v876, %v877
    %v879 = vsel %vm399, %v820, 0.0
    %v880 = vadd.f32 %v878, %v879
    %v881 = vsel %vm399, %v821, 0.0
    %v882 = vadd.f32 %v880, %v881
    %v883 = vsel %vm399, %v822, 0.0
    %v884 = vadd.f32 %v882, %v883
    %v885 = vsel %vm399, %v823, 0.0
    %v886 = vadd.f32 %v884, %v885
    %v887 = vrot.slane %v886, 4
    %v888 = vadd.f32 %v886, %v887
    %v889 = vrot.slane %v888, 2
    %v890 = vadd.f32 %v888, %v889
    %v891 = vrot.slane %v890, 1
    %v892 = vadd.f32 %v890, %v891
    %v893 = vmul.f32 %v892, 0.00390625
    %vm894 = vcmask 1040384
    %v895 = vsel %vm894, %v469, %v893
    %v896 = vld [vmem:[%s3] sm:$0xff]
    %v897 = vld [vmem:[%s3 + $0x8] sm:$0xff]
    %v898 = vld [vmem:[%s3 + $0x10] sm:$0xff]
    %v899 = vld [vmem:[%s3 + $0x18] sm:$0xff]
    %v900 = vld [vmem:[%s3 + $0x20] sm:$0xff]
    %v901 = vld [vmem:[%s3 + $0x28] sm:$0xff]
    %v902 = vld [vmem:[%s3 + $0x30] sm:$0xff]
    %v903 = vld [vmem:[%s3 + $0x38] sm:$0xff]
    %v904 = vld [vmem:[%s4] sm:$0x1]
    %v906 = vlaneseq
    %v907 = vshrl.u32 %v906, 7
    %v908 = vsub.s32 0, %v907
    %v909 = vrot.slane %v904, %v908
    %v912 = vsel %vm399, %v895, 0
    %914 = vmatprep.subr.mxu0 0.0
    %915 = vmatpush1.msra.mxu0 0.0
    %916 = vmatprep.subr.mxu0 0.0
    %917 = vmatpush1.msra.mxu0 0.0
    %918 = vmatprep.subr.mxu0 0.0
    %919 = vmatpush1.msra.mxu0 0.0
    %920 = vmatprep.subr.mxu0 0.0
    %921 = vmatpush1.msra.mxu0 0.0
    %922 = vmatprep.subr.mxu0 0.0
    %923 = vmatpush1.msra.mxu0 0.0
    %924 = vmatprep.subr.mxu0 0.0
    %925 = vmatpush1.msra.mxu0 0.0
    %926 = vmatprep.subr.mxu0 0.0
    %927 = vmatpush1.msra.mxu0 0.0
    %928 = vmatprep.subr.mxu0 0.0
    %929 = vmatpush1.msra.mxu0 0.0
    %930 = vmatprep.subr.mxu0 0.0
    %931 = vmatpush1.msra.mxu0 %v903
    %932 = vmatprep.subr.mxu0 0.0
    %933 = vmatpush1.msra.mxu0 %v902
    %934 = vmatprep.subr.mxu0 0.0
    %935 = vmatpush1.msra.mxu0 %v901
    %936 = vmatprep.subr.mxu0 0.0
    %937 = vmatpush1.msra.mxu0 %v900
    %938 = vmatprep.subr.mxu0 0.0
    %939 = vmatpush1.msra.mxu0 %v899
    %940 = vmatprep.subr.mxu0 0.0
    %941 = vmatpush1.msra.mxu0 %v898
    %942 = vmatprep.subr.mxu0 0.0
    %943 = vmatpush1.msra.mxu0 %v897
    %944 = vmatprep.subr.mxu0 0.0
    %945 = vmatpush1.msra.mxu0 %v896
    %946 = vmatprep.subr.mxu0 0.0
    %947 = vmatpush2.msra.mxu0 0.0
    %948 = vmatprep.subr.mxu0 0.0
    %949 = vmatpush2.msra.mxu0 0.0
    %950 = vmatprep.subr.mxu0 0.0
    %951 = vmatpush2.msra.mxu0 0.0
    %952 = vmatprep.subr.mxu0 0.0
    %953 = vmatpush2.msra.mxu0 0.0
    %954 = vmatprep.subr.mxu0 0.0
    %955 = vmatpush2.msra.mxu0 0.0
    %956 = vmatprep.subr.mxu0 0.0
    %957 = vmatpush2.msra.mxu0 0.0
    %958 = vmatprep.subr.mxu0 0.0
    %959 = vmatpush2.msra.mxu0 0.0
    %960 = vmatprep.subr.mxu0 0.0
    %961 = vmatpush2.msra.mxu0 0.0
    %962 = vmatprep.subr.mxu0 0.0
    %963 = vmatpush2.msra.mxu0 0.0
    %964 = vmatprep.subr.mxu0 0.0
    %965 = vmatpush2.msra.mxu0 0.0
    %966 = vmatprep.subr.mxu0 0.0
    %967 = vmatpush2.msra.mxu0 0.0
    %968 = vmatprep.subr.mxu0 0.0
    %969 = vmatpush2.msra.mxu0 0.0
    %970 = vmatprep.subr.mxu0 0.0
    %971 = vmatpush2.msra.mxu0 0.0
    %972 = vmatprep.subr.mxu0 0.0
    %973 = vmatpush2.msra.mxu0 0.0
    %974 = vmatprep.subr.mxu0 0.0
    %975 = vmatpush2.msra.mxu0 0.0
    %976 = vmatprep.subr.mxu0 0.0
    %977 = vmatpush2.msra.mxu0 0.0
    %978 = vmatprep.mubr.f32.mxu0 0.0
    %979 = vmatmul.mubr.f32.gmra.mxu0 %v912
    %v980 = vpop.f32.mrf.mxu0
    %v981 = vadd.f32 %v909, %v980
    %v982 = vpop.f32.mrf.mxu0
    %983 = vdwg.mxu0
    %984 = vst [vmem:[#allocation2] sm:$0x3] %v981
    // Predicated region
    $region22: #{tpu_custom_call.1} parent=1 // pred_check
      _
    $region23: #{tpu_custom_call.1} parent=1 // pred_check_branch
      %986 = sbr.rel (0) target = $region25
    $region24: #{tpu_custom_call.1} parent=1 // pred_region
      %s988 = ssub.s32 32, 32
      %989 = vsyncadd [#allocation3], %s988
      %s991 = sshll.u32 [#allocation2], 4
      %s992 = int_to_ptr.vmem [resolvable:$true] %s991
      %994 = dma.vmem_to_hbm [thread:$0]  %s992, 32, %s5, [#allocation3]
    $region25: #{tpu_custom_call.1} parent=1 // pred_fallthru
      _
    // Predicated region
    $region26: #{tpu_custom_call.1} parent=1 // pred_check
      _
    $region27: #{tpu_custom_call.1} parent=1 // pred_check_branch
      %996 = sbr.rel (0) target = $region29
    $region28: #{tpu_custom_call.1} parent=1 // pred_region
      %997 = dma.done [#allocation3], 32
    $region29: #{tpu_custom_call.1} parent=1 // pred_fallthru
      _
    %998 = vsyncpa [#allocation3], 1

</llo_original>
